<compile_context>
chip_gen: v7x
topology: tpu7x:2x2x1
jax: 0.10.0
libtpu: 0.0.40
codegen_flags: <defaults>
</compile_context>

<pallas_src>
import math

import jax
import jax.numpy as jnp
from jax.experimental import pallas as pl
from jax.experimental.pallas import tpu as pltpu  # noqa: F401  (TPU backend)

# ---------------------------------------------------------------------------
# Model hyperparameters (small, TPU-tile friendly)
# ---------------------------------------------------------------------------
B = 2          # batch
S = 8          # sequence length
H = 32         # hidden size
FF = 64        # MLP inner size
V = 128        # vocab size (lane-dense logits)
VOCAB_IN = 100 # input embedding table rows
BS = B * S     # folded row count for the matmul slab


# ---------------------------------------------------------------------------
# Pallas kernel: single invocation (no grid); every operand is a full VMEM
# block (total resident footprint is well under 1 MiB on all generations).
# ---------------------------------------------------------------------------
def _transformer_kernel(
    x_ref,       # (B, S, H)  f32  embedded tokens
    mask_ref,    # (B, S)     f32  attention mask (1 = keep, 0 = pad)
    ln_ref,      # (4, H)     f32  rows: [ln1_g, ln1_b, ln2_g, ln2_b]
    wqkv_ref,    # (H, 3H)    bf16 fused Q|K|V projection
    wo_ref,      # (H, H)     bf16
    w1_ref,      # (H, FF)    bf16
    w2_ref,      # (FF, H)    bf16
    wlm_ref,     # (H, V)     bf16
    out_ref,     # (B, S, V)  f32  logits
):
    x = x_ref[...].reshape(BS, H)          # fold batch -> (B*S, H) slab
    ln = ln_ref[...]

    def layernorm(h, g, b):                # f32 VPU math on all chips
        mu = jnp.mean(h, axis=-1, keepdims=True)
        var = jnp.mean((h - mu) ** 2, axis=-1, keepdims=True)
        return (h - mu) * jax.lax.rsqrt(var + 1e-5) * g + b

    # --- fused QKV projection: one (16,32)x(32,96) MXU push ------------------
    xn = layernorm(x, ln[0:1, :], ln[1:2, :])
    qkv = jnp.dot(xn.astype(jnp.bfloat16), wqkv_ref[...],
                  preferred_element_type=jnp.float32)          # (B*S, 3H) f32
    q = qkv[:, 0 * H:1 * H].reshape(B, S, H)
    k = qkv[:, 1 * H:2 * H].reshape(B, S, H)
    v = qkv[:, 2 * H:3 * H].reshape(B, S, H)

    # --- masked softmax attention (f32 softmax, bf16 MXU operands) -----------
    bias = (1.0 - mask_ref[...]) * -1e9                        # (B, S) key bias
    scale = 1.0 / math.sqrt(H)
    scores = jnp.einsum("bqd,bkd->bqk",
                        q.astype(jnp.bfloat16), k.astype(jnp.bfloat16),
                        preferred_element_type=jnp.float32)    # (B, S, S)
    scores = scores * scale + bias[:, None, :]
    scores = scores - jnp.max(scores, axis=-1, keepdims=True)
    p = jnp.exp(scores)
    p = p * pl.reciprocal(jnp.sum(p, axis=-1, keepdims=True), approx=True)

    attn = jnp.einsum("bqk,bkd->bqd",
                      p.astype(jnp.bfloat16), v.astype(jnp.bfloat16),
                      preferred_element_type=jnp.float32)      # (B, S, H)
    h = x + jnp.dot(attn.reshape(BS, H).astype(jnp.bfloat16), wo_ref[...],
                    preferred_element_type=jnp.float32)

    # --- MLP (pre-LN) ---------------------------------------------------------
    hn = layernorm(h, ln[2:3, :], ln[3:4, :])
    inner = jax.nn.gelu(
        jnp.dot(hn.astype(jnp.bfloat16), w1_ref[...],
                preferred_element_type=jnp.float32),
        approximate=True,
    )
    m = h + jnp.dot(inner.astype(jnp.bfloat16), w2_ref[...],
                    preferred_element_type=jnp.float32)

    # --- LM head: single (B*S, H) x (H, V) matmul, lane-dense 128-wide output
    logits = jnp.dot(m.astype(jnp.bfloat16), wlm_ref[...],
                     preferred_element_type=jnp.float32)       # (B*S, V)
    out_ref[...] = logits.reshape(B, S, V)


@jax.jit
def custom_model_forward(input_ids, attention_mask, params):
    """JAX/Pallas equivalent of CustomModel.forward -> logits (B, S, V)."""
    # Glue: embedding lookup + positional embedding (gather stays in XLA).
    x = (params["emb"][input_ids] + params["pos"][None, :, :]).astype(jnp.float32)
    mask = attention_mask.astype(jnp.float32)                  # (B, S)

    # No grid: one kernel invocation, every operand a full VMEM block.
    return pl.pallas_call(
        _transformer_kernel,
        out_shape=jax.ShapeDtypeStruct((B, S, V), jnp.float32),
    )(
        x, mask,
        params["ln"],
        params["wqkv"], params["wo"],
        params["w1"], params["w2"], params["wlm"],
    )


def init_params(key):
    """Deterministic synthetic parameters (no checkpoint loading)."""
    ks = jax.random.split(key, 10)
    s = lambda fan_in: 1.0 / math.sqrt(fan_in)
    wq = jax.random.normal(ks[2], (H, H), jnp.float32) * s(H)
    wk = jax.random.normal(ks[3], (H, H), jnp.float32) * s(H)
    wv = jax.random.normal(ks[4], (H, H), jnp.float32) * s(H)
    ln = jnp.stack(
        [jnp.ones(H), jnp.zeros(H), jnp.ones(H), jnp.zeros(H)]
    ).astype(jnp.float32)                                      # (4, H)
    return {
        "emb": jax.random.normal(ks[0], (VOCAB_IN, H), jnp.float32) * 0.02,
        "pos": jax.random.normal(ks[1], (S, H), jnp.float32) * 0.02,
        # MXU weights stored in bf16 (halves DMA bytes; native MXU dtype).
        "wqkv": jnp.concatenate([wq, wk, wv], axis=1).astype(jnp.bfloat16),
        "wo": (jax.random.normal(ks[5], (H, H), jnp.float32) * s(H)).astype(jnp.bfloat16),
        "ln": ln,
        "w1": (jax.random.normal(ks[6], (H, FF), jnp.float32) * s(H)).astype(jnp.bfloat16),
        "w2": (jax.random.normal(ks[7], (FF, H), jnp.float32) * s(FF)).astype(jnp.bfloat16),
        "wlm": (jax.random.normal(ks[8], (H, V), jnp.float32) * s(H)).astype(jnp.bfloat16),
    }


if __name__ == "__main__":
    key = jax.random.PRNGKey(0)
    k_ids, k_params = jax.random.split(key)

    input_ids = jax.random.randint(k_ids, (B, S), 0, VOCAB_IN, dtype=jnp.int32)
    # Ragged attention mask: second example has 2 padding tokens.
    attention_mask = jnp.array(
        [[1] * S, [1] * (S - 2) + [0, 0]], dtype=jnp.int32
    )

    params = init_params(k_params)

    logits = custom_model_forward(input_ids, attention_mask, params)
    jax.block_until_ready(logits)

    assert logits.shape == (B, S, V), logits.shape
    assert logits.dtype == jnp.float32
    assert bool(jnp.all(jnp.isfinite(logits)))
    print("KERNEL_OK")
</pallas_src>

<mosaic_0001>
module attributes {stable_mosaic.version = 11 : i64} {
  func.func @_transformer_kernel(%arg0: memref<2x8x32xf32, #tpu.memory_space<vmem>>, %arg1: memref<2x8xf32, #tpu.memory_space<vmem>>, %arg2: memref<4x32xf32, #tpu.memory_space<vmem>>, %arg3: memref<32x96xbf16, #tpu.memory_space<vmem>>, %arg4: memref<32x32xbf16, #tpu.memory_space<vmem>>, %arg5: memref<32x64xbf16, #tpu.memory_space<vmem>>, %arg6: memref<64x32xbf16, #tpu.memory_space<vmem>>, %arg7: memref<32x128xbf16, #tpu.memory_space<vmem>>, %arg8: memref<2x8x128xf32, #tpu.memory_space<vmem>>) attributes {dimension_semantics = [], scalar_prefetch = 0 : i64, scratch_operands = 0 : i64, tpu.core_type = #tpu.core_type<tc>} {
    %c0 = arith.constant 0 : index
    %c0_0 = arith.constant 0 : index
    %c0_1 = arith.constant 0 : index
    %0 = vector.load %arg0[%c0, %c0_0, %c0_1] : memref<2x8x32xf32, #tpu.memory_space<vmem>>, vector<2x8x32xf32>
    %1 = vector.shape_cast %0 : vector<2x8x32xf32> to vector<16x32xf32>
    %c0_2 = arith.constant 0 : index
    %c0_3 = arith.constant 0 : index
    %2 = vector.load %arg2[%c0_2, %c0_3] : memref<4x32xf32, #tpu.memory_space<vmem>>, vector<4x32xf32>
    %3 = vector.extract_strided_slice %2 {offsets = [0, 0], sizes = [1, 32], strides = [1, 1]} : vector<4x32xf32> to vector<1x32xf32>
    %4 = vector.extract_strided_slice %2 {offsets = [1, 0], sizes = [1, 32], strides = [1, 1]} : vector<4x32xf32> to vector<1x32xf32>
    %cst = arith.constant dense<0.000000e+00> : vector<16xf32>
    %5 = vector.multi_reduction <add>, %1, %cst [1] : vector<16x32xf32> to vector<16xf32>
    %6 = vector.shape_cast %5 : vector<16xf32> to vector<16x1xf32>
    %cst_4 = arith.constant 3.200000e+01 : f32
    %7 = vector.broadcast %cst_4 : f32 to vector<16x1xf32>
    %8 = arith.divf %6, %7 : vector<16x1xf32>
    %9 = vector.broadcast %8 : vector<16x1xf32> to vector<16x32xf32>
    %10 = arith.subf %1, %9 : vector<16x32xf32>
    %11 = arith.mulf %10, %10 : vector<16x32xf32>
    %cst_5 = arith.constant dense<0.000000e+00> : vector<16xf32>
    %12 = vector.multi_reduction <add>, %11, %cst_5 [1] : vector<16x32xf32> to vector<16xf32>
    %13 = vector.shape_cast %12 : vector<16xf32> to vector<16x1xf32>
    %cst_6 = arith.constant 3.200000e+01 : f32
    %14 = vector.broadcast %cst_6 : f32 to vector<16x1xf32>
    %15 = arith.divf %13, %14 : vector<16x1xf32>
    %16 = vector.broadcast %8 : vector<16x1xf32> to vector<16x32xf32>
    %17 = arith.subf %1, %16 : vector<16x32xf32>
    %cst_7 = arith.constant 9.99999974E-6 : f32
    %18 = vector.broadcast %cst_7 : f32 to vector<16x1xf32>
    %19 = arith.addf %15, %18 : vector<16x1xf32>
    %20 = math.rsqrt %19 : vector<16x1xf32>
    %21 = vector.broadcast %20 : vector<16x1xf32> to vector<16x32xf32>
    %22 = arith.mulf %17, %21 : vector<16x32xf32>
    %23 = vector.broadcast %3 : vector<1x32xf32> to vector<16x32xf32>
    %24 = arith.mulf %22, %23 : vector<16x32xf32>
    %25 = vector.broadcast %4 : vector<1x32xf32> to vector<16x32xf32>
    %26 = arith.addf %24, %25 : vector<16x32xf32>
    %27 = arith.truncf %26 : vector<16x32xf32> to vector<16x32xbf16>
    %c0_8 = arith.constant 0 : index
    %c0_9 = arith.constant 0 : index
    %28 = vector.load %arg3[%c0_8, %c0_9] : memref<32x96xbf16, #tpu.memory_space<vmem>>, vector<32x96xbf16>
    %cst_10 = arith.constant dense<0.000000e+00> : vector<16x96xf32>
    %29 = tpu.matmul %27, %28, %cst_10 {dimension_numbers = #tpu.dot_dimension_numbers<[1], [0], [0], [1], [0, 0, 1, 1], [], []>} : vector<16x32xbf16>, vector<32x96xbf16>, vector<16x96xf32> -> vector<16x96xf32>
    %30 = vector.extract_strided_slice %29 {offsets = [0, 0], sizes = [16, 32], strides = [1, 1]} : vector<16x96xf32> to vector<16x32xf32>
    %31 = vector.shape_cast %30 : vector<16x32xf32> to vector<2x8x32xf32>
    %32 = vector.extract_strided_slice %29 {offsets = [0, 32], sizes = [16, 32], strides = [1, 1]} : vector<16x96xf32> to vector<16x32xf32>
    %33 = vector.shape_cast %32 : vector<16x32xf32> to vector<2x8x32xf32>
    %34 = vector.extract_strided_slice %29 {offsets = [0, 64], sizes = [16, 32], strides = [1, 1]} : vector<16x96xf32> to vector<16x32xf32>
    %35 = vector.shape_cast %34 : vector<16x32xf32> to vector<2x8x32xf32>
    %c0_11 = arith.constant 0 : index
    %c0_12 = arith.constant 0 : index
    %36 = vector.load %arg1[%c0_11, %c0_12] : memref<2x8xf32, #tpu.memory_space<vmem>>, vector<2x8xf32>
    %cst_13 = arith.constant 1.000000e+00 : f32
    %37 = vector.broadcast %cst_13 : f32 to vector<2x8xf32>
    %38 = arith.subf %37, %36 : vector<2x8xf32>
    %cst_14 = arith.constant -1.000000e+09 : f32
    %39 = vector.broadcast %cst_14 : f32 to vector<2x8xf32>
    %40 = arith.mulf %38, %39 : vector<2x8xf32>
    %41 = arith.truncf %31 : vector<2x8x32xf32> to vector<2x8x32xbf16>
    %42 = arith.truncf %33 : vector<2x8x32xf32> to vector<2x8x32xbf16>
    "tpu.trace_start"() <{level = 10 : i32, message = "bqd,bkd->bqk"}> : () -> ()
    %cst_15 = arith.constant dense<0.000000e+00> : vector<2x8x8xf32>
    %43 = tpu.matmul %41, %42, %cst_15 {dimension_numbers = #tpu.dot_dimension_numbers<[2], [2], [1], [1], [0, 0, 0, 1, 1, 1], [0], [0]>} : vector<2x8x32xbf16>, vector<2x8x32xbf16>, vector<2x8x8xf32> -> vector<2x8x8xf32>
    "tpu.trace_stop"() : () -> ()
    %cst_16 = arith.constant 0.176776692 : f32
    %44 = vector.broadcast %cst_16 : f32 to vector<2x8x8xf32>
    %45 = arith.mulf %43, %44 : vector<2x8x8xf32>
    %46 = vector.shape_cast %40 : vector<2x8xf32> to vector<2x1x8xf32>
    %47 = vector.broadcast %46 : vector<2x1x8xf32> to vector<2x8x8xf32>
    %48 = arith.addf %45, %47 : vector<2x8x8xf32>
    %cst_17 = arith.constant dense<0xFF800000> : vector<2x8xf32>
    %49 = vector.multi_reduction <maximumf>, %48, %cst_17 [2] : vector<2x8x8xf32> to vector<2x8xf32>
    %50 = vector.shape_cast %49 : vector<2x8xf32> to vector<2x8x1xf32>
    %51 = vector.broadcast %50 : vector<2x8x1xf32> to vector<2x8x8xf32>
    %52 = arith.subf %48, %51 : vector<2x8x8xf32>
    %53 = math.exp %52 : vector<2x8x8xf32>
    %cst_18 = arith.constant dense<0.000000e+00> : vector<2x8xf32>
    %54 = vector.multi_reduction <add>, %53, %cst_18 [2] : vector<2x8x8xf32> to vector<2x8xf32>
    %55 = vector.shape_cast %54 : vector<2x8xf32> to vector<2x8x1xf32>
    %56 = tpu.reciprocal %55 {approx = true} : vector<2x8x1xf32> -> vector<2x8x1xf32>
    %57 = vector.broadcast %56 : vector<2x8x1xf32> to vector<2x8x8xf32>
    %58 = arith.mulf %53, %57 : vector<2x8x8xf32>
    %59 = arith.truncf %58 : vector<2x8x8xf32> to vector<2x8x8xbf16>
    %60 = arith.truncf %35 : vector<2x8x32xf32> to vector<2x8x32xbf16>
    "tpu.trace_start"() <{level = 10 : i32, message = "bqk,bkd->bqd"}> : () -> ()
    %cst_19 = arith.constant dense<0.000000e+00> : vector<2x8x32xf32>
    %61 = tpu.matmul %59, %60, %cst_19 {dimension_numbers = #tpu.dot_dimension_numbers<[2], [1], [1], [2], [0, 0, 0, 1, 1, 2], [0], [0]>} : vector<2x8x8xbf16>, vector<2x8x32xbf16>, vector<2x8x32xf32> -> vector<2x8x32xf32>
    "tpu.trace_stop"() : () -> ()
    %62 = vector.shape_cast %61 : vector<2x8x32xf32> to vector<16x32xf32>
    %63 = arith.truncf %62 : vector<16x32xf32> to vector<16x32xbf16>
    %c0_20 = arith.constant 0 : index
    %c0_21 = arith.constant 0 : index
    %64 = vector.load %arg4[%c0_20, %c0_21] : memref<32x32xbf16, #tpu.memory_space<vmem>>, vector<32x32xbf16>
    %cst_22 = arith.constant dense<0.000000e+00> : vector<16x32xf32>
    %65 = tpu.matmul %63, %64, %cst_22 {dimension_numbers = #tpu.dot_dimension_numbers<[1], [0], [0], [1], [0, 0, 1, 1], [], []>} : vector<16x32xbf16>, vector<32x32xbf16>, vector<16x32xf32> -> vector<16x32xf32>
    %66 = arith.addf %1, %65 : vector<16x32xf32>
    %67 = vector.extract_strided_slice %2 {offsets = [2, 0], sizes = [1, 32], strides = [1, 1]} : vector<4x32xf32> to vector<1x32xf32>
    %68 = vector.extract_strided_slice %2 {offsets = [3, 0], sizes = [1, 32], strides = [1, 1]} : vector<4x32xf32> to vector<1x32xf32>
    %cst_23 = arith.constant dense<0.000000e+00> : vector<16xf32>
    %69 = vector.multi_reduction <add>, %66, %cst_23 [1] : vector<16x32xf32> to vector<16xf32>
    %70 = vector.shape_cast %69 : vector<16xf32> to vector<16x1xf32>
    %cst_24 = arith.constant 3.200000e+01 : f32
    %71 = vector.broadcast %cst_24 : f32 to vector<16x1xf32>
    %72 = arith.divf %70, %71 : vector<16x1xf32>
    %73 = vector.broadcast %72 : vector<16x1xf32> to vector<16x32xf32>
    %74 = arith.subf %66, %73 : vector<16x32xf32>
    %75 = arith.mulf %74, %74 : vector<16x32xf32>
    %cst_25 = arith.constant dense<0.000000e+00> : vector<16xf32>
    %76 = vector.multi_reduction <add>, %75, %cst_25 [1] : vector<16x32xf32> to vector<16xf32>
    %77 = vector.shape_cast %76 : vector<16xf32> to vector<16x1xf32>
    %cst_26 = arith.constant 3.200000e+01 : f32
    %78 = vector.broadcast %cst_26 : f32 to vector<16x1xf32>
    %79 = arith.divf %77, %78 : vector<16x1xf32>
    %80 = vector.broadcast %72 : vector<16x1xf32> to vector<16x32xf32>
    %81 = arith.subf %66, %80 : vector<16x32xf32>
    %cst_27 = arith.constant 9.99999974E-6 : f32
    %82 = vector.broadcast %cst_27 : f32 to vector<16x1xf32>
    %83 = arith.addf %79, %82 : vector<16x1xf32>
    %84 = math.rsqrt %83 : vector<16x1xf32>
    %85 = vector.broadcast %84 : vector<16x1xf32> to vector<16x32xf32>
    %86 = arith.mulf %81, %85 : vector<16x32xf32>
    %87 = vector.broadcast %67 : vector<1x32xf32> to vector<16x32xf32>
    %88 = arith.mulf %86, %87 : vector<16x32xf32>
    %89 = vector.broadcast %68 : vector<1x32xf32> to vector<16x32xf32>
    %90 = arith.addf %88, %89 : vector<16x32xf32>
    %91 = arith.truncf %90 : vector<16x32xf32> to vector<16x32xbf16>
    %c0_28 = arith.constant 0 : index
    %c0_29 = arith.constant 0 : index
    %92 = vector.load %arg5[%c0_28, %c0_29] : memref<32x64xbf16, #tpu.memory_space<vmem>>, vector<32x64xbf16>
    %cst_30 = arith.constant dense<0.000000e+00> : vector<16x64xf32>
    %93 = tpu.matmul %91, %92, %cst_30 {dimension_numbers = #tpu.dot_dimension_numbers<[1], [0], [0], [1], [0, 0, 1, 1], [], []>} : vector<16x32xbf16>, vector<32x64xbf16>, vector<16x64xf32> -> vector<16x64xf32>
    %94 = arith.mulf %93, %93 : vector<16x64xf32>
    %95 = arith.mulf %93, %94 : vector<16x64xf32>
    %cst_31 = arith.constant 4.471500e-02 : f32
    %96 = vector.broadcast %cst_31 : f32 to vector<16x64xf32>
    %97 = arith.mulf %96, %95 : vector<16x64xf32>
    %98 = arith.addf %93, %97 : vector<16x64xf32>
    %cst_32 = arith.constant 0.797884583 : f32
    %99 = vector.broadcast %cst_32 : f32 to vector<16x64xf32>
    %100 = arith.mulf %99, %98 : vector<16x64xf32>
    %101 = math.tanh %100 : vector<16x64xf32>
    %cst_33 = arith.constant 1.000000e+00 : f32
    %102 = vector.broadcast %cst_33 : f32 to vector<16x64xf32>
    %103 = arith.addf %102, %101 : vector<16x64xf32>
    %cst_34 = arith.constant 5.000000e-01 : f32
    %104 = vector.broadcast %cst_34 : f32 to vector<16x64xf32>
    %105 = arith.mulf %104, %103 : vector<16x64xf32>
    %106 = arith.mulf %93, %105 : vector<16x64xf32>
    %107 = arith.truncf %106 : vector<16x64xf32> to vector<16x64xbf16>
    %c0_35 = arith.constant 0 : index
    %c0_36 = arith.constant 0 : index
    %108 = vector.load %arg6[%c0_35, %c0_36] : memref<64x32xbf16, #tpu.memory_space<vmem>>, vector<64x32xbf16>
    %cst_37 = arith.constant dense<0.000000e+00> : vector<16x32xf32>
    %109 = tpu.matmul %107, %108, %cst_37 {dimension_numbers = #tpu.dot_dimension_numbers<[1], [0], [0], [1], [0, 0, 1, 1], [], []>} : vector<16x64xbf16>, vector<64x32xbf16>, vector<16x32xf32> -> vector<16x32xf32>
    %110 = arith.addf %66, %109 : vector<16x32xf32>
    %111 = arith.truncf %110 : vector<16x32xf32> to vector<16x32xbf16>
    %c0_38 = arith.constant 0 : index
    %c0_39 = arith.constant 0 : index
    %112 = vector.load %arg7[%c0_38, %c0_39] : memref<32x128xbf16, #tpu.memory_space<vmem>>, vector<32x128xbf16>
    %cst_40 = arith.constant dense<0.000000e+00> : vector<16x128xf32>
    %113 = tpu.matmul %111, %112, %cst_40 {dimension_numbers = #tpu.dot_dimension_numbers<[1], [0], [0], [1], [0, 0, 1, 1], [], []>} : vector<16x32xbf16>, vector<32x128xbf16>, vector<16x128xf32> -> vector<16x128xf32>
    %114 = vector.shape_cast %113 : vector<16x128xf32> to vector<2x8x128xf32>
    %c0_41 = arith.constant 0 : index
    %c0_42 = arith.constant 0 : index
    %c0_43 = arith.constant 0 : index
    %115 = vector.load %arg8[%c0_41, %c0_42, %c0_43] : memref<2x8x128xf32, #tpu.memory_space<vmem>>, vector<2x8x128xf32>
    tpu.vector_store %arg8[%c0_41, %c0_42, %c0_43], %114 {strides = array<i32>} : memref<2x8x128xf32, #tpu.memory_space<vmem>>, vector<2x8x128xf32>,
    return
  }
}

</mosaic_0001>

<llo_original>
// kernel: custom_model_forward.1
$region0: #{custom_model_forward.1}
  #allocation0 [shape = 'u32[]', space=smem, size = 0x4, offset = 0x4, fixed_abs, tag = 'smem constant byte address 0x4 - core index']
  #allocation1 [shape = 'u32[144,128]{1,0:T(1,128)}', space=vmem, size = 0x12000, scoped, tag = 'internal scratch']
  %s0 = inlined_call_operand.vmem [shape: f32[2,8,32], index: 0, kind: input, shape index: {}]
  %s1 = inlined_call_operand.vmem [shape: f32[2,8], index: 1, kind: input, shape index: {}]
  %s2 = inlined_call_operand.vmem [shape: f32[4,32], index: 2, kind: input, shape index: {}]
  %s3 = inlined_call_operand.vmem [shape: bf16[32,96], index: 3, kind: input, shape index: {}]
  %s4 = inlined_call_operand.vmem [shape: bf16[32,32], index: 4, kind: input, shape index: {}]
  %s5 = inlined_call_operand.vmem [shape: bf16[32,64], index: 5, kind: input, shape index: {}]
  %s6 = inlined_call_operand.vmem [shape: bf16[64,32], index: 6, kind: input, shape index: {}]
  %s7 = inlined_call_operand.vmem [shape: bf16[32,128], index: 7, kind: input, shape index: {}]
  %s8 = inlined_call_operand.hbm [shape: f32[2,8,128], index: 8, kind: output, shape index: {}]
  %s9 = sld [smem:[#allocation0]]
  $region42: #{custom_model_forward.1} parent=0
    _
  %s11 = ssub.s32 1, %s9
  %s12 = scalar_select 0, %s11, %s9
  $region1: #{custom_model_forward.1} parent=0
    #allocation2 [shape = 'u8[8192]{0}', space=vmem, size = 0x2000, scoped, tag = 'output window, operand 0, single buffered']
    #allocation3 [shape = 's32[1]{0}', space=sflag, size = 0x4, scoped, tag = 'scoped memory for custom_model_forward.1']
    %13 = vsyncpa [#allocation3], 0
    // Predicated region
    $region2: #{custom_model_forward.1} parent=1 // pred_check
      _
    $region3: #{custom_model_forward.1} parent=1 // pred_check_branch
      %15 = sbr.rel (0) target = $region5
    $region4: #{custom_model_forward.1} parent=1 // pred_region
      _
    $region5: #{custom_model_forward.1} parent=1 // pred_fallthru
      _
    // Predicated region
    $region6: #{custom_model_forward.1} parent=1 // pred_check
      _
    $region7: #{custom_model_forward.1} parent=1 // pred_check_branch
      %17 = sbr.rel (0) target = $region9
    $region8: #{custom_model_forward.1} parent=1 // pred_region
      _
    $region9: #{custom_model_forward.1} parent=1 // pred_fallthru
      _
    // Predicated region
    $region10: #{custom_model_forward.1} parent=1 // pred_check
      _
    $region11: #{custom_model_forward.1} parent=1 // pred_check_branch
      %19 = sbr.rel (0) target = $region13
    $region12: #{custom_model_forward.1} parent=1 // pred_region
      _
    $region13: #{custom_model_forward.1} parent=1 // pred_fallthru
      _
    // Predicated region
    $region14: #{custom_model_forward.1} parent=1 // pred_check
      _
    $region15: #{custom_model_forward.1} parent=1 // pred_check_branch
      %21 = sbr.rel (0) target = $region17
    $region16: #{custom_model_forward.1} parent=1 // pred_region
      _
    $region17: #{custom_model_forward.1} parent=1 // pred_fallthru
      _
    // Predicated region
    $region18: #{custom_model_forward.1} parent=1 // pred_check
      _
    $region19: #{custom_model_forward.1} parent=1 // pred_check_branch
      %23 = sbr.rel (0) target = $region21
    $region20: #{custom_model_forward.1} parent=1 // pred_region
      _
    $region21: #{custom_model_forward.1} parent=1 // pred_fallthru
      _
    // Predicated region
    $region22: #{custom_model_forward.1} parent=1 // pred_check
      _
    $region23: #{custom_model_forward.1} parent=1 // pred_check_branch
      %25 = sbr.rel (0) target = $region25
    $region24: #{custom_model_forward.1} parent=1 // pred_region
      _
    $region25: #{custom_model_forward.1} parent=1 // pred_fallthru
      _
    // Predicated region
    $region26: #{custom_model_forward.1} parent=1 // pred_check
      _
    $region27: #{custom_model_forward.1} parent=1 // pred_check_branch
      %27 = sbr.rel (0) target = $region29
    $region28: #{custom_model_forward.1} parent=1 // pred_region
      _
    $region29: #{custom_model_forward.1} parent=1 // pred_fallthru
      _
    // Predicated region
    $region30: #{custom_model_forward.1} parent=1 // pred_check
      _
    $region31: #{custom_model_forward.1} parent=1 // pred_check_branch
      %29 = sbr.rel (0) target = $region33
    $region32: #{custom_model_forward.1} parent=1 // pred_region
      _
    $region33: #{custom_model_forward.1} parent=1 // pred_fallthru
      _
    %v31 = vld [vmem:[%s0] sm:$0xff]
    %v32 = vld [vmem:[%s0 + $0x8] sm:$0xff]
    %v33 = vld [vmem:[%s2] sm:$0xf]
    %vm34 = vcmask 261120
    %v35 = vsel %vm34, %v31, 0.0
    %36 = vadd.xlane.f32.xlu0 %v35
    %v37 = vpop.xlane.xlu0 %36
    %v38 = vsel %vm34, %v32, 0.0
    %39 = vadd.xlane.f32.xlu0 %v38
    %v40 = vpop.xlane.xlu0 %39
    %v41 = vrcp.pop 32.0
    %v42 = vmul.f32 %v37, %v41
    %v43 = vmul.f32 %v40, %v41
    %v44 = vsub.f32 %v31, %v42
    %v45 = vsub.f32 %v32, %v43
    %v46 = vmul.f32 %v44, %v44
    %v47 = vmul.f32 %v45, %v45
    %v48 = vsel %vm34, %v46, 0.0
    %49 = vadd.xlane.f32.xlu0 %v48
    %v50 = vpop.xlane.xlu0 %49
    %v51 = vsel %vm34, %v47, 0.0
    %52 = vadd.xlane.f32.xlu0 %v51
    %v53 = vpop.xlane.xlu0 %52
    %v54 = vmul.f32 %v50, %v41
    %v55 = vmul.f32 %v53, %v41
    %v56 = vadd.f32 %v54, 1e-05
    %v57 = vadd.f32 %v55, 1e-05
    %v58 = vrsqrt.pop %v56
    %v59 = vrsqrt.pop %v57
    %v60 = vmul.f32 %v44, %v58
    %v61 = vmul.f32 %v45, %v59
    %v62 = vlaneseq
    %v63 = vshrl.u32 %v62, 7
    %v64 = vsub.s32 0, %v63
    %v65 = vrot.slane %v33, %v64
    %v66 = vmul.f32 %v60, %v65
    %v67 = vmul.f32 %v61, %v65
    %v68 = vlaneseq
    %v69 = vshrl.u32 %v68, 7
    %v70 = vsub.s32 1, %v69
    %v71 = vrot.slane %v33, %v70
    %v72 = vadd.f32 %v66, %v71
    %v73 = vadd.f32 %v67, %v71
    %v74 = vpack.c.bf16 %v73, %v72
    %v75 = vld [vmem:[%s3] sm:$0xf]
    %v76 = vld [vmem:[%s3 + $0x4] sm:$0xf]
    %v77 = vld [vmem:[%s3 + $0x8] sm:$0xf]
    %v78 = vld [vmem:[%s3 + $0xc] sm:$0xf]
    %v83 = vunpack.c.l.b16 %v75
    %v84 = vunpack.c.l.b16 %v76
    %v85 = vunpack.c.l.b16 %v77
    %v86 = vunpack.c.l.b16 %v78
    %v87 = vpack.c.b16 %v84, %v83
    %v88 = vpack.c.b16 %v86, %v85
    %v92 = vsel %vm34, %v74, 0
    %94 = vmatprep.subr.bf16.mxu0 0
    %95 = vmatpush1.bf16.msra.mxu0 %v87
    %96 = vmatprep.subr.bf16.mxu0 0
    %97 = vmatpush1.bf16.msra.mxu0 %v88
    %98 = vmatprep.subr.bf16.mxu0 0
    %99 = vmatpush1.bf16.msra.mxu0 0
    %100 = vmatprep.subr.bf16.mxu0 0
    %101 = vmatpush1.bf16.msra.mxu0 0
    %102 = vmatprep.subr.bf16.mxu0 0
    %103 = vmatpush1.bf16.msra.mxu0 0
    %104 = vmatprep.subr.bf16.mxu0 0
    %105 = vmatpush1.bf16.msra.mxu0 0
    %106 = vmatprep.subr.bf16.mxu0 0
    %107 = vmatpush1.bf16.msra.mxu0 0
    %108 = vmatprep.subr.bf16.mxu0 0
    %109 = vmatpush1.bf16.msra.mxu0 0
    %110 = vmatprep.subr.bf16.mxu0 0
    %111 = vmatpush1.bf16.msra.mxu0 0
    %112 = vmatprep.subr.bf16.mxu0 0
    %113 = vmatpush1.bf16.msra.mxu0 0
    %114 = vmatprep.subr.bf16.mxu0 0
    %115 = vmatpush1.bf16.msra.mxu0 0
    %116 = vmatprep.subr.bf16.mxu0 0
    %117 = vmatpush1.bf16.msra.mxu0 0
    %118 = vmatprep.subr.bf16.mxu0 0
    %119 = vmatpush1.bf16.msra.mxu0 0
    %120 = vmatprep.subr.bf16.mxu0 0
    %121 = vmatpush1.bf16.msra.mxu0 0
    %122 = vmatprep.subr.bf16.mxu0 0
    %123 = vmatpush1.bf16.msra.mxu0 0
    %124 = vmatprep.subr.bf16.mxu0 0
    %125 = vmatpush1.bf16.msra.mxu0 0
    %126 = vmatprep.mubr.bf16.mxu0 0
    %127 = vmatmul.mubr.bf16.gmra.mrb[0].mxu0 %v92
    %v128 = vpop.f32.mrb[0].mxu0
    %v129 = vadd.f32 0.0, %v128
    %v130 = vpop.f32.mrb[0].mxu0
    %v131 = vpop.f32.mrb[0].mxu0
    %v132 = vadd.f32 0.0, %v131
    %v133 = vpop.f32.mrb[0].mxu0
    %134 = vdwg.mxu0
    %v135 = vld [vmem:[%s1] sm:$0x3]
    %v136 = vsub.f32 1.0, %v135
    %v137 = vmul.f32 %v136, -1e+09
    %v138 = vpack.c.bf16 %v129, %v129
    %v139 = vpack.c.bf16 %v132, %v132
    %141 = vrot.lane.b32.xlu0 %v138, 96
    %v142 = vpop.permute.xlu0 %141
    %v144 = vsel %vm34, %v138, 0
    %v147 = vsel %vm34, %v142, 0
    %149 = vmatprep.subr.bf16.mxu0 0
    %150 = vmatpush1.bf16.xpose.msra.mxu0 %v147
    %151 = vmatprep.subr.bf16.mxu0 0
    %152 = vmatpush1.bf16.xpose.msra.mxu0 0
    %153 = vmatprep.subr.bf16.mxu0 0
    %154 = vmatpush1.bf16.xpose.msra.mxu0 0
    %155 = vmatprep.subr.bf16.mxu0 0
    %156 = vmatpush1.bf16.xpose.msra.mxu0 0
    %157 = vmatprep.subr.bf16.mxu0 0
    %158 = vmatpush1.bf16.xpose.msra.mxu0 0
    %159 = vmatprep.subr.bf16.mxu0 0
    %160 = vmatpush1.bf16.xpose.msra.mxu0 0
    %161 = vmatprep.subr.bf16.mxu0 0
    %162 = vmatpush1.bf16.xpose.msra.mxu0 0
    %163 = vmatprep.subr.bf16.mxu0 0
    %164 = vmatpush1.bf16.xpose.msra.mxu0 0
    %165 = vmatprep.subr.bf16.mxu0 0
    %166 = vmatpush1.bf16.xpose.msra.mxu0 0
    %167 = vmatprep.subr.bf16.mxu0 0
    %168 = vmatpush1.bf16.xpose.msra.mxu0 0
    %169 = vmatprep.subr.bf16.mxu0 0
    %170 = vmatpush1.bf16.xpose.msra.mxu0 0
    %171 = vmatprep.subr.bf16.mxu0 0
    %172 = vmatpush1.bf16.xpose.msra.mxu0 0
    %173 = vmatprep.subr.bf16.mxu0 0
    %174 = vmatpush1.bf16.xpose.msra.mxu0 0
    %175 = vmatprep.subr.bf16.mxu0 0
    %176 = vmatpush1.bf16.xpose.msra.mxu0 0
    %177 = vmatprep.subr.bf16.mxu0 0
    %178 = vmatpush1.bf16.xpose.msra.mxu0 0
    %179 = vmatprep.subr.bf16.mxu0 0
    %180 = vmatpush1.bf16.xpose.msra.mxu0 0
    %181 = vmatprep.mubr.bf16.mxu0 0
    %182 = vmatmul.mubr.bf16.gmra.mrb[0].mxu0 %v144
    %v183 = vpop.f32.mrb[0].mxu0
    %v184 = vadd.f32 0.0, %v183
    %v185 = vpop.f32.mrb[0].mxu0
    %v186 = vpop.f32.mrb[0].mxu0
    %v187 = vpop.f32.mrb[0].mxu0
    %188 = vdwg.mxu0
    %190 = vrot.lane.b32.xlu0 %v139, 96
    %v191 = vpop.permute.xlu0 %190
    %v193 = vsel %vm34, %v139, 0
    %v196 = vsel %vm34, %v191, 0
    %198 = vmatprep.subr.bf16.mxu0 0
    %199 = vmatpush1.bf16.xpose.msra.mxu0 %v196
    %200 = vmatprep.subr.bf16.mxu0 0
    %201 = vmatpush1.bf16.xpose.msra.mxu0 0
    %202 = vmatprep.subr.bf16.mxu0 0
    %203 = vmatpush1.bf16.xpose.msra.mxu0 0
    %204 = vmatprep.subr.bf16.mxu0 0
    %205 = vmatpush1.bf16.xpose.msra.mxu0 0
    %206 = vmatprep.subr.bf16.mxu0 0
    %207 = vmatpush1.bf16.xpose.msra.mxu0 0
    %208 = vmatprep.subr.bf16.mxu0 0
    %209 = vmatpush1.bf16.xpose.msra.mxu0 0
    %210 = vmatprep.subr.bf16.mxu0 0
    %211 = vmatpush1.bf16.xpose.msra.mxu0 0
    %212 = vmatprep.subr.bf16.mxu0 0
    %213 = vmatpush1.bf16.xpose.msra.mxu0 0
    %214 = vmatprep.subr.bf16.mxu0 0
    %215 = vmatpush1.bf16.xpose.msra.mxu0 0
    %216 = vmatprep.subr.bf16.mxu0 0
    %217 = vmatpush1.bf16.xpose.msra.mxu0 0
    %218 = vmatprep.subr.bf16.mxu0 0
    %219 = vmatpush1.bf16.xpose.msra.mxu0 0
    %220 = vmatprep.subr.bf16.mxu0 0
    %221 = vmatpush1.bf16.xpose.msra.mxu0 0
    %222 = vmatprep.subr.bf16.mxu0 0
    %223 = vmatpush1.bf16.xpose.msra.mxu0 0
    %224 = vmatprep.subr.bf16.mxu0 0
    %225 = vmatpush1.bf16.xpose.msra.mxu0 0
    %226 = vmatprep.subr.bf16.mxu0 0
    %227 = vmatpush1.bf16.xpose.msra.mxu0 0
    %228 = vmatprep.subr.bf16.mxu0 0
    %229 = vmatpush1.bf16.xpose.msra.mxu0 0
    %230 = vmatprep.mubr.bf16.mxu0 0
    %231 = vmatmul.mubr.bf16.gmra.mrb[0].mxu0 %v193
    %v232 = vpop.f32.mrb[0].mxu0
    %v233 = vadd.f32 0.0, %v232
    %v234 = vpop.f32.mrb[0].mxu0
    %v235 = vpop.f32.mrb[0].mxu0
    %v236 = vpop.f32.mrb[0].mxu0
    %237 = vdwg.mxu0
    %v238 = vmul.f32 %v184, 0.17677669
    %v239 = vmul.f32 %v233, 0.17677669
    %v242 = vunpack.c.l.s4 1966171168
    %v243 = vunpack.c.0.s8 %v242
    %v244 = vlaneseq
    %v245 = vshrl.u32 %v244, 7
    %v246 = vsub.s32 %v243, %v245
    %v247 = vrot.slane %v137, %v246
    %v248 = vcombine.high %v247, %v247
    %v250 = vunpack.c.l.s4 1966171168
    %v251 = vunpack.c.0.s8 %v250
    %v252 = vlaneseq
    %v253 = vshrl.u32 %v252, 7
    %v254 = vsub.s32 %v251, %v253
    %v255 = vrot.slane %v247, %v254
    %v257 = vunpack.c.l.s4 1966171168
    %v258 = vunpack.c.0.s8 %v257
    %v259 = vlaneseq
    %v260 = vshrl.u32 %v259, 7
    %v261 = vsub.s32 %v258, %v260
    %v262 = vrot.slane %v248, %v261
    %v263 = vlaneseq
    %v264 = vshrl.u32 %v263, 7
    %v265 = vsub.s32 0, %v264
    %v266 = vrot.slane %v255, %v265
    %v267 = vlaneseq
    %v268 = vshrl.u32 %v267, 7
    %v269 = vsub.s32 0, %v268
    %v270 = vrot.slane %v262, %v269
    %v273 = vadd.f32 %v238, %v266
    %v274 = vadd.f32 %v239, %v270
    %vm275 = vcmask 64512
    %v276 = vsel %vm275, %v273, -inf
    %277 = vmax.xlane.f32.xlu0 %v276
    %v278 = vpop.xlane.xlu0 %277
    %v279 = vsel %vm275, %v274, -inf
    %280 = vmax.xlane.f32.xlu0 %v279
    %v281 = vpop.xlane.xlu0 %280
    %v282 = vsub.f32 %v273, %v278
    %v283 = vsub.f32 %v274, %v281
    %v284 = vmul.f32 %v282, 1.442695
    %v285 = vpow.pop %v284
    %v286 = vmul.f32 %v283, 1.442695
    %v287 = vpow.pop %v286
    %v288 = vsel %vm275, %v285, 0.0
    %289 = vadd.xlane.f32.xlu0 %v288
    %v290 = vpop.xlane.xlu0 %289
    %v291 = vsel %vm275, %v287, 0.0
    %292 = vadd.xlane.f32.xlu0 %v291
    %v293 = vpop.xlane.xlu0 %292
    %v294 = vrcp.pop %v290
    %v295 = vrcp.pop %v293
    %v296 = vmul.f32 %v285, %v294
    %v297 = vmul.f32 %v287, %v295
    %v298 = vpack.c.bf16 %v296, %v296
    %v299 = vpack.c.bf16 %v297, %v297
    %300 = vrot.lane.b32.xlu0 %v138, 64
    %v301 = vpop.permute.xlu0 %300
    %v303 = vsel %vm275, %v298, 0
    %vm305 = vcmask 1043456
    %v307 = vsel %vm305, %v301, 0
    %309 = vmatprep.subr.bf16.mxu0 0
    %310 = vmatpush1.bf16.msra.mxu0 %v307
    %311 = vmatprep.subr.bf16.mxu0 0
    %312 = vmatpush1.bf16.msra.mxu0 0
    %313 = vmatprep.subr.bf16.mxu0 0
    %314 = vmatpush1.bf16.msra.mxu0 0
    %315 = vmatprep.subr.bf16.mxu0 0
    %316 = vmatpush1.bf16.msra.mxu0 0
    %317 = vmatprep.subr.bf16.mxu0 0
    %318 = vmatpush1.bf16.msra.mxu0 0
    %319 = vmatprep.subr.bf16.mxu0 0
    %320 = vmatpush1.bf16.msra.mxu0 0
    %321 = vmatprep.subr.bf16.mxu0 0
    %322 = vmatpush1.bf16.msra.mxu0 0
    %323 = vmatprep.subr.bf16.mxu0 0
    %324 = vmatpush1.bf16.msra.mxu0 0
    %325 = vmatprep.subr.bf16.mxu0 0
    %326 = vmatpush1.bf16.msra.mxu0 0
    %327 = vmatprep.subr.bf16.mxu0 0
    %328 = vmatpush1.bf16.msra.mxu0 0
    %329 = vmatprep.subr.bf16.mxu0 0
    %330 = vmatpush1.bf16.msra.mxu0 0
    %331 = vmatprep.subr.bf16.mxu0 0
    %332 = vmatpush1.bf16.msra.mxu0 0
    %333 = vmatprep.subr.bf16.mxu0 0
    %334 = vmatpush1.bf16.msra.mxu0 0
    %335 = vmatprep.subr.bf16.mxu0 0
    %336 = vmatpush1.bf16.msra.mxu0 0
    %337 = vmatprep.subr.bf16.mxu0 0
    %338 = vmatpush1.bf16.msra.mxu0 0
    %339 = vmatprep.subr.bf16.mxu0 0
    %340 = vmatpush1.bf16.msra.mxu0 0
    %341 = vmatprep.mubr.bf16.mxu0 0
    %342 = vmatmul.mubr.bf16.gmra.mrb[0].mxu0 %v303
    %v343 = vpop.f32.mrb[0].mxu0
    %v344 = vadd.f32 0.0, %v343
    %v345 = vpop.f32.mrb[0].mxu0
    %v346 = vpop.f32.mrb[0].mxu0
    %v347 = vpop.f32.mrb[0].mxu0
    %348 = vdwg.mxu0
    %349 = vrot.lane.b32.xlu0 %v139, 64
    %v350 = vpop.permute.xlu0 %349
    %v352 = vsel %vm275, %v299, 0
    %v355 = vsel %vm305, %v350, 0
    %357 = vmatprep.subr.bf16.mxu0 0
    %358 = vmatpush1.bf16.msra.mxu0 %v355
    %359 = vmatprep.subr.bf16.mxu0 0
    %360 = vmatpush1.bf16.msra.mxu0 0
    %361 = vmatprep.subr.bf16.mxu0 0
    %362 = vmatpush1.bf16.msra.mxu0 0
    %363 = vmatprep.subr.bf16.mxu0 0
    %364 = vmatpush1.bf16.msra.mxu0 0
    %365 = vmatprep.subr.bf16.mxu0 0
    %366 = vmatpush1.bf16.msra.mxu0 0
    %367 = vmatprep.subr.bf16.mxu0 0
    %368 = vmatpush1.bf16.msra.mxu0 0
    %369 = vmatprep.subr.bf16.mxu0 0
    %370 = vmatpush1.bf16.msra.mxu0 0
    %371 = vmatprep.subr.bf16.mxu0 0
    %372 = vmatpush1.bf16.msra.mxu0 0
    %373 = vmatprep.subr.bf16.mxu0 0
    %374 = vmatpush1.bf16.msra.mxu0 0
    %375 = vmatprep.subr.bf16.mxu0 0
    %376 = vmatpush1.bf16.msra.mxu0 0
    %377 = vmatprep.subr.bf16.mxu0 0
    %378 = vmatpush1.bf16.msra.mxu0 0
    %379 = vmatprep.subr.bf16.mxu0 0
    %380 = vmatpush1.bf16.msra.mxu0 0
    %381 = vmatprep.subr.bf16.mxu0 0
    %382 = vmatpush1.bf16.msra.mxu0 0
    %383 = vmatprep.subr.bf16.mxu0 0
    %384 = vmatpush1.bf16.msra.mxu0 0
    %385 = vmatprep.subr.bf16.mxu0 0
    %386 = vmatpush1.bf16.msra.mxu0 0
    %387 = vmatprep.subr.bf16.mxu0 0
    %388 = vmatpush1.bf16.msra.mxu0 0
    %389 = vmatprep.mubr.bf16.mxu0 0
    %390 = vmatmul.mubr.bf16.gmra.mrb[0].mxu0 %v352
    %v391 = vpop.f32.mrb[0].mxu0
    %v392 = vadd.f32 0.0, %v391
    %v393 = vpop.f32.mrb[0].mxu0
    %v394 = vpop.f32.mrb[0].mxu0
    %v395 = vpop.f32.mrb[0].mxu0
    %396 = vdwg.mxu0
    %v397 = vpack.c.bf16 %v392, %v344
    %v398 = vld [vmem:[%s4] sm:$0xf]
    %v399 = vld [vmem:[%s4 + $0x4] sm:$0xf]
    %v400 = vld [vmem:[%s4 + $0x8] sm:$0xf]
    %v401 = vld [vmem:[%s4 + $0xc] sm:$0xf]
    %v406 = vunpack.c.l.b16 %v398
    %v407 = vunpack.c.l.b16 %v399
    %v408 = vunpack.c.l.b16 %v400
    %v409 = vunpack.c.l.b16 %v401
    %v410 = vpack.c.b16 %v407, %v406
    %v411 = vpack.c.b16 %v409, %v408
    %v415 = vsel %vm34, %v397, 0
    %417 = vmatprep.subr.bf16.mxu0 0
    %418 = vmatpush1.bf16.msra.mxu0 %v410
    %419 = vmatprep.subr.bf16.mxu0 0
    %420 = vmatpush1.bf16.msra.mxu0 %v411
    %421 = vmatprep.subr.bf16.mxu0 0
    %422 = vmatpush1.bf16.msra.mxu0 0
    %423 = vmatprep.subr.bf16.mxu0 0
    %424 = vmatpush1.bf16.msra.mxu0 0
    %425 = vmatprep.subr.bf16.mxu0 0
    %426 = vmatpush1.bf16.msra.mxu0 0
    %427 = vmatprep.subr.bf16.mxu0 0
    %428 = vmatpush1.bf16.msra.mxu0 0
    %429 = vmatprep.subr.bf16.mxu0 0
    %430 = vmatpush1.bf16.msra.mxu0 0
    %431 = vmatprep.subr.bf16.mxu0 0
    %432 = vmatpush1.bf16.msra.mxu0 0
    %433 = vmatprep.subr.bf16.mxu0 0
    %434 = vmatpush1.bf16.msra.mxu0 0
    %435 = vmatprep.subr.bf16.mxu0 0
    %436 = vmatpush1.bf16.msra.mxu0 0
    %437 = vmatprep.subr.bf16.mxu0 0
    %438 = vmatpush1.bf16.msra.mxu0 0
    %439 = vmatprep.subr.bf16.mxu0 0
    %440 = vmatpush1.bf16.msra.mxu0 0
    %441 = vmatprep.subr.bf16.mxu0 0
    %442 = vmatpush1.bf16.msra.mxu0 0
    %443 = vmatprep.subr.bf16.mxu0 0
    %444 = vmatpush1.bf16.msra.mxu0 0
    %445 = vmatprep.subr.bf16.mxu0 0
    %446 = vmatpush1.bf16.msra.mxu0 0
    %447 = vmatprep.subr.bf16.mxu0 0
    %448 = vmatpush1.bf16.msra.mxu0 0
    %449 = vmatprep.mubr.bf16.mxu0 0
    %450 = vmatmul.mubr.bf16.gmra.mrb[0].mxu0 %v415
    %v451 = vpop.f32.mrb[0].mxu0
    %v452 = vadd.f32 0.0, %v451
    %v453 = vpop.f32.mrb[0].mxu0
    %v454 = vpop.f32.mrb[0].mxu0
    %v455 = vadd.f32 0.0, %v454
    %v456 = vpop.f32.mrb[0].mxu0
    %457 = vdwg.mxu0
    %v458 = vadd.f32 %v31, %v452
    %v459 = vadd.f32 %v32, %v455
    %v460 = vsel %vm34, %v458, 0.0
    %461 = vadd.xlane.f32.xlu0 %v460
    %v462 = vpop.xlane.xlu0 %461
    %v463 = vsel %vm34, %v459, 0.0
    %464 = vadd.xlane.f32.xlu0 %v463
    %v465 = vpop.xlane.xlu0 %464
    %v466 = vmul.f32 %v462, %v41
    %v467 = vmul.f32 %v465, %v41
    %v468 = vsub.f32 %v458, %v466
    %v469 = vsub.f32 %v459, %v467
    %v470 = vmul.f32 %v468, %v468
    %v471 = vmul.f32 %v469, %v469
    %v472 = vsel %vm34, %v470, 0.0
    %473 = vadd.xlane.f32.xlu0 %v472
    %v474 = vpop.xlane.xlu0 %473
    %v475 = vsel %vm34, %v471, 0.0
    %476 = vadd.xlane.f32.xlu0 %v475
    %v477 = vpop.xlane.xlu0 %476
    %v478 = vmul.f32 %v474, %v41
    %v479 = vmul.f32 %v477, %v41
    %v480 = vadd.f32 %v478, 1e-05
    %v481 = vadd.f32 %v479, 1e-05
    %v482 = vrsqrt.pop %v480
    %v483 = vrsqrt.pop %v481
    %v484 = vmul.f32 %v468, %v482
    %v485 = vmul.f32 %v469, %v483
    %v486 = vlaneseq
    %v487 = vshrl.u32 %v486, 7
    %v488 = vsub.s32 2, %v487
    %v489 = vrot.slane %v33, %v488
    %v490 = vmul.f32 %v484, %v489
    %v491 = vmul.f32 %v485, %v489
    %v492 = vlaneseq
    %v493 = vshrl.u32 %v492, 7
    %v494 = vsub.s32 3, %v493
    %v495 = vrot.slane %v33, %v494
    %v496 = vadd.f32 %v490, %v495
    %v497 = vadd.f32 %v491, %v495
    %v498 = vpack.c.bf16 %v497, %v496
    %v499 = vld [vmem:[%s5] sm:$0xf]
    %v500 = vld [vmem:[%s5 + $0x4] sm:$0xf]
    %v501 = vld [vmem:[%s5 + $0x8] sm:$0xf]
    %v502 = vld [vmem:[%s5 + $0xc] sm:$0xf]
    %v507 = vunpack.c.l.b16 %v499
    %v508 = vunpack.c.l.b16 %v500
    %v509 = vunpack.c.l.b16 %v501
    %v510 = vunpack.c.l.b16 %v502
    %v511 = vpack.c.b16 %v508, %v507
    %v512 = vpack.c.b16 %v510, %v509
    %v516 = vsel %vm34, %v498, 0
    %518 = vmatprep.subr.bf16.mxu0 0
    %519 = vmatpush1.bf16.msra.mxu0 %v511
    %520 = vmatprep.subr.bf16.mxu0 0
    %521 = vmatpush1.bf16.msra.mxu0 %v512
    %522 = vmatprep.subr.bf16.mxu0 0
    %523 = vmatpush1.bf16.msra.mxu0 0
    %524 = vmatprep.subr.bf16.mxu0 0
    %525 = vmatpush1.bf16.msra.mxu0 0
    %526 = vmatprep.subr.bf16.mxu0 0
    %527 = vmatpush1.bf16.msra.mxu0 0
    %528 = vmatprep.subr.bf16.mxu0 0
    %529 = vmatpush1.bf16.msra.mxu0 0
    %530 = vmatprep.subr.bf16.mxu0 0
    %531 = vmatpush1.bf16.msra.mxu0 0
    %532 = vmatprep.subr.bf16.mxu0 0
    %533 = vmatpush1.bf16.msra.mxu0 0
    %534 = vmatprep.subr.bf16.mxu0 0
    %535 = vmatpush1.bf16.msra.mxu0 0
    %536 = vmatprep.subr.bf16.mxu0 0
    %537 = vmatpush1.bf16.msra.mxu0 0
    %538 = vmatprep.subr.bf16.mxu0 0
    %539 = vmatpush1.bf16.msra.mxu0 0
    %540 = vmatprep.subr.bf16.mxu0 0
    %541 = vmatpush1.bf16.msra.mxu0 0
    %542 = vmatprep.subr.bf16.mxu0 0
    %543 = vmatpush1.bf16.msra.mxu0 0
    %544 = vmatprep.subr.bf16.mxu0 0
    %545 = vmatpush1.bf16.msra.mxu0 0
    %546 = vmatprep.subr.bf16.mxu0 0
    %547 = vmatpush1.bf16.msra.mxu0 0
    %548 = vmatprep.subr.bf16.mxu0 0
    %549 = vmatpush1.bf16.msra.mxu0 0
    %550 = vmatprep.mubr.bf16.mxu0 0
    %551 = vmatmul.mubr.bf16.gmra.mrb[0].mxu0 %v516
    %v552 = vpop.f32.mrb[0].mxu0
    %v553 = vadd.f32 0.0, %v552
    %v554 = vpop.f32.mrb[0].mxu0
    %v555 = vpop.f32.mrb[0].mxu0
    %v556 = vadd.f32 0.0, %v555
    %v557 = vpop.f32.mrb[0].mxu0
    %558 = vdwg.mxu0
    %v559 = vmul.f32 %v553, %v553
    %v560 = vmul.f32 %v556, %v556
    %v561 = vmul.f32 %v553, %v559
    %v562 = vmul.f32 %v556, %v560
    %v563 = vmul.f32 %v561, 0.044715
    %v564 = vmul.f32 %v562, 0.044715
    %v565 = vadd.f32 %v553, %v563
    %v566 = vadd.f32 %v556, %v564
    %v567 = vmul.f32 %v565, 0.7978846
    %v568 = vmul.f32 %v566, 0.7978846
    %v569 = vtanh.pop %v567
    %v570 = vtanh.pop %v568
    %v571 = vadd.f32 %v569, 1.0
    %v572 = vadd.f32 %v570, 1.0
    %v573 = vmul.f32 %v571, 0.5
    %v574 = vmul.f32 %v572, 0.5
    %v575 = vmul.f32 %v553, %v573
    %v576 = vmul.f32 %v556, %v574
    %v577 = vpack.c.bf16 %v576, %v575
    %v578 = vld [vmem:[%s6] sm:$0xf]
    %v579 = vld [vmem:[%s6 + $0x4] sm:$0xf]
    %v580 = vld [vmem:[%s6 + $0x8] sm:$0xf]
    %v581 = vld [vmem:[%s6 + $0xc] sm:$0xf]
    %v582 = vld [vmem:[%s6 + $0x10] sm:$0xf]
    %v583 = vld [vmem:[%s6 + $0x14] sm:$0xf]
    %v584 = vld [vmem:[%s6 + $0x18] sm:$0xf]
    %v585 = vld [vmem:[%s6 + $0x1c] sm:$0xf]
    %v594 = vunpack.c.l.b16 %v578
    %v595 = vunpack.c.l.b16 %v579
    %v596 = vunpack.c.l.b16 %v580
    %v597 = vunpack.c.l.b16 %v581
    %v598 = vunpack.c.l.b16 %v582
    %v599 = vunpack.c.l.b16 %v583
    %v600 = vunpack.c.l.b16 %v584
    %v601 = vunpack.c.l.b16 %v585
    %v602 = vpack.c.b16 %v595, %v594
    %v603 = vpack.c.b16 %v597, %v596
    %v604 = vpack.c.b16 %v599, %v598
    %v605 = vpack.c.b16 %v601, %v600
    %vm610 = vcmask 523264
    %v612 = vsel %vm610, %v577, 0
    %614 = vmatprep.subr.bf16.mxu0 0
    %615 = vmatpush1.bf16.msra.mxu0 %v602
    %616 = vmatprep.subr.bf16.mxu0 0
    %617 = vmatpush1.bf16.msra.mxu0 %v603
    %618 = vmatprep.subr.bf16.mxu0 0
    %619 = vmatpush1.bf16.msra.mxu0 %v604
    %620 = vmatprep.subr.bf16.mxu0 0
    %621 = vmatpush1.bf16.msra.mxu0 %v605
    %622 = vmatprep.subr.bf16.mxu0 0
    %623 = vmatpush1.bf16.msra.mxu0 0
    %624 = vmatprep.subr.bf16.mxu0 0
    %625 = vmatpush1.bf16.msra.mxu0 0
    %626 = vmatprep.subr.bf16.mxu0 0
    %627 = vmatpush1.bf16.msra.mxu0 0
    %628 = vmatprep.subr.bf16.mxu0 0
    %629 = vmatpush1.bf16.msra.mxu0 0
    %630 = vmatprep.subr.bf16.mxu0 0
    %631 = vmatpush1.bf16.msra.mxu0 0
    %632 = vmatprep.subr.bf16.mxu0 0
    %633 = vmatpush1.bf16.msra.mxu0 0
    %634 = vmatprep.subr.bf16.mxu0 0
    %635 = vmatpush1.bf16.msra.mxu0 0
    %636 = vmatprep.subr.bf16.mxu0 0
    %637 = vmatpush1.bf16.msra.mxu0 0
    %638 = vmatprep.subr.bf16.mxu0 0
    %639 = vmatpush1.bf16.msra.mxu0 0
    %640 = vmatprep.subr.bf16.mxu0 0
    %641 = vmatpush1.bf16.msra.mxu0 0
    %642 = vmatprep.subr.bf16.mxu0 0
    %643 = vmatpush1.bf16.msra.mxu0 0
    %644 = vmatprep.subr.bf16.mxu0 0
    %645 = vmatpush1.bf16.msra.mxu0 0
    %646 = vmatprep.mubr.bf16.mxu0 0
    %647 = vmatmul.mubr.bf16.gmra.mrb[0].mxu0 %v612
    %v648 = vpop.f32.mrb[0].mxu0
    %v649 = vadd.f32 0.0, %v648
    %v650 = vpop.f32.mrb[0].mxu0
    %v651 = vpop.f32.mrb[0].mxu0
    %v652 = vadd.f32 0.0, %v651
    %v653 = vpop.f32.mrb[0].mxu0
    %654 = vdwg.mxu0
    %v655 = vadd.f32 %v458, %v649
    %v656 = vadd.f32 %v459, %v652
    %v657 = vpack.c.bf16 %v656, %v655
    %v658 = vld [vmem:[%s7] sm:$0xf]
    %v659 = vld [vmem:[%s7 + $0x4] sm:$0xf]
    %v660 = vld [vmem:[%s7 + $0x8] sm:$0xf]
    %v661 = vld [vmem:[%s7 + $0xc] sm:$0xf]
    %v666 = vunpack.c.l.b16 %v658
    %v667 = vunpack.c.l.b16 %v659
    %v668 = vunpack.c.l.b16 %v660
    %v669 = vunpack.c.l.b16 %v661
    %v670 = vpack.c.b16 %v667, %v666
    %v671 = vpack.c.b16 %v669, %v668
    %v675 = vsel %vm34, %v657, 0
    %677 = vmatprep.subr.bf16.mxu0 0
    %678 = vmatpush1.bf16.msra.mxu0 %v670
    %679 = vmatprep.subr.bf16.mxu0 0
    %680 = vmatpush1.bf16.msra.mxu0 %v671
    %681 = vmatprep.subr.bf16.mxu0 0
    %682 = vmatpush1.bf16.msra.mxu0 0
    %683 = vmatprep.subr.bf16.mxu0 0
    %684 = vmatpush1.bf16.msra.mxu0 0
    %685 = vmatprep.subr.bf16.mxu0 0
    %686 = vmatpush1.bf16.msra.mxu0 0
    %687 = vmatprep.subr.bf16.mxu0 0
    %688 = vmatpush1.bf16.msra.mxu0 0
    %689 = vmatprep.subr.bf16.mxu0 0
    %690 = vmatpush1.bf16.msra.mxu0 0
    %691 = vmatprep.subr.bf16.mxu0 0
    %692 = vmatpush1.bf16.msra.mxu0 0
    %693 = vmatprep.subr.bf16.mxu0 0
    %694 = vmatpush1.bf16.msra.mxu0 0
    %695 = vmatprep.subr.bf16.mxu0 0
    %696 = vmatpush1.bf16.msra.mxu0 0
    %697 = vmatprep.subr.bf16.mxu0 0
    %698 = vmatpush1.bf16.msra.mxu0 0
    %699 = vmatprep.subr.bf16.mxu0 0
    %700 = vmatpush1.bf16.msra.mxu0 0
    %701 = vmatprep.subr.bf16.mxu0 0
    %702 = vmatpush1.bf16.msra.mxu0 0
    %703 = vmatprep.subr.bf16.mxu0 0
    %704 = vmatpush1.bf16.msra.mxu0 0
    %705 = vmatprep.subr.bf16.mxu0 0
    %706 = vmatpush1.bf16.msra.mxu0 0
    %707 = vmatprep.subr.bf16.mxu0 0
    %708 = vmatpush1.bf16.msra.mxu0 0
    %709 = vmatprep.mubr.bf16.mxu0 0
    %710 = vmatmul.mubr.bf16.gmra.mrb[0].mxu0 %v675
    %v711 = vpop.f32.mrb[0].mxu0
    %v712 = vadd.f32 0.0, %v711
    %v713 = vpop.f32.mrb[0].mxu0
    %v714 = vpop.f32.mrb[0].mxu0
    %v715 = vadd.f32 0.0, %v714
    %v716 = vpop.f32.mrb[0].mxu0
    %717 = vdwg.mxu0
    %718 = vst [vmem:[#allocation2] sm:$0xff] %v712
    %719 = vst [vmem:[#allocation2 + $0x8] sm:$0xff] %v715
    // Predicated region
    $region34: #{custom_model_forward.1} parent=1 // pred_check
      _
    $region35: #{custom_model_forward.1} parent=1 // pred_check_branch
      %721 = sbr.rel (0) target = $region37
    $region36: #{custom_model_forward.1} parent=1 // pred_region
      %s723 = ssub.s32 256, 256
      %724 = vsyncadd [#allocation3], %s723
      %s725 = sshll.u32 [#allocation2], 4
      %s726 = int_to_ptr.vmem [resolvable:$true] %s725
      %731 = dma.vmem_to_hbm [thread:$0]  %s726, 256, %s8, [#allocation3], 128, 128, 8
    $region37: #{custom_model_forward.1} parent=1 // pred_fallthru
      _
    // Predicated region
    $region38: #{custom_model_forward.1} parent=1 // pred_check
      _
    $region39: #{custom_model_forward.1} parent=1 // pred_check_branch
      %733 = sbr.rel (0) target = $region41
    $region40: #{custom_model_forward.1} parent=1 // pred_region
      %734 = dma.done [#allocation3], 256
    $region41: #{custom_model_forward.1} parent=1 // pred_fallthru
      _
    %735 = vsyncpa [#allocation3], 1

</llo_original>
